<compile_context>
chip_gen: v5e
topology: v5e:2x2
jax: 0.10.0
libtpu: 0.0.40
codegen_flags: <defaults>
</compile_context>

<pallas_src>
import functools

import jax
import jax.numpy as jnp
from jax import lax
from jax.experimental import pallas as pl
from jax.experimental.pallas import tpu as pltpu


def _round_up(x, m):
    return ((x + m - 1) // m) * m


def _supcon_kernel(tanc_ref, card_ref, qT_ref, k_ref, tkey_ref, out_ref, *,
                   inv_temperature, precision):
    """One grid step = one tile of TM anchors (lane axis) vs. all B keys (sublane axis).

    tanc_ref: (1, TM) int32  anchor labels (padded anchors carry -1)
    card_ref: (1, TM) f32    number of positives per anchor (padded anchors carry 1.0)
    qT_ref:   (D, TM) f32    anchors, pre-transposed (lane-major)
    k_ref:    (B, D)  f32    all keys, resident across grid steps
    tkey_ref: (B, 1)  int32  key labels, resident
    out_ref:  (1, TM) f32    per-anchor loss (lane-dense)
    """
    qT = qT_ref[...] * inv_temperature            # fold 1/T into the small operand
    k = k_ref[...]
    b = k.shape[0]
    tm = qT.shape[1]

    # Canonical (B, D) x (D, TM) matmul -- no transposes of either operand.
    dot = lax.dot_general(
        k, qT,
        dimension_numbers=(((1,), (0,)), ((), ())),
        preferred_element_type=jnp.float32,
        precision=precision,
    )                                             # (B, TM): dot[j, a] = <k_j, q_a> / T

    # Numerically-stable exp, matching torch: subtract per-anchor max, add 1e-5.
    col_max = jnp.max(dot, axis=0, keepdims=True)            # (1, TM)
    exp_dot = jnp.exp(dot - col_max) + 1e-5                   # (B, TM)
    log_exp = jnp.log(exp_dot)                                # keeps the +1e-5 parity

    # Masks as f32 multipliers (one compare + convert each, no jnp.where selects).
    anchor0 = pl.program_id(0) * tm
    key_idx = lax.broadcasted_iota(jnp.int32, (b, tm), 0)
    anc_idx = lax.broadcasted_iota(jnp.int32, (b, tm), 1) + anchor0
    not_diag = (key_idx != anc_idx).astype(jnp.float32)                     # exclude anchor itself
    positive = (tkey_ref[...] == tanc_ref[...]).astype(jnp.float32) * not_diag

    denom = jnp.sum(exp_dot * not_diag, axis=0, keepdims=True)              # (1, TM)
    num = jnp.sum(log_exp * positive, axis=0, keepdims=True)                # (1, TM)

    # per-anchor = sum_j positive * (-log(exp_dot / denom)) / card
    #            = log(denom) - (sum_j positive * log(exp_dot)) / card
    out_ref[...] = jnp.log(denom) - num / card_ref[...]


def supervised_contrastive_loss(projections, targets, temperature=0.07,
                                block_anchors=None,
                                precision=lax.Precision.HIGHEST):
    """projections: [B, D] float, targets: [B] int -> scalar float32."""
    B, D = projections.shape
    projections = projections.astype(jnp.float32)
    targets = targets.astype(jnp.int32)

    # Generation-aware anchor tile: 128 on v2-v5 (128x128 MXU), 256 on v6e/v7x.
    if block_anchors is None:
        kind = ""
        try:
            kind = jax.devices()[0].device_kind.lower()
        except Exception:
            pass
        block_anchors = 128 if any(v in kind for v in ("v2", "v3", "v4", "v5")) else 256

    TM = block_anchors if B > block_anchors else max(_round_up(B, 8), 8)
    Bp = _round_up(B, TM)
    pad = Bp - B

    # Anchor-side (tiled) operands; keys (and their labels) stay unpadded and resident.
    q_t = projections.T                                                # (D, B), one-time layout op
    t_anc = targets.reshape(1, B)
    # Positives-per-anchor, hoisted out of the kernel.
    card = ((targets[:, None] == targets[None, :]).sum(axis=1) - 1).astype(jnp.float32)
    card = card.reshape(1, B)
    if pad:
        q_t = jnp.pad(q_t, ((0, 0), (0, pad)))
        t_anc = jnp.pad(t_anc, ((0, 0), (0, pad)), constant_values=-1)
        card = jnp.pad(card, ((0, 0), (0, pad)), constant_values=1.0)  # keeps padded lanes finite
    t_key = targets.reshape(B, 1)

    grid = (Bp // TM,)

    # Explicit scoped-VMEM budget: resident keys + key labels, double-buffered anchor
    # tiles, (B, TM) elementwise temporaries, plus slack.  (VMEM blocks pad the trailing
    # two dims to (8, 128).)
    lane_tm = _round_up(TM, 128)
    keys_bytes = _round_up(B, 8) * _round_up(D, 128) * 4
    key_lbl_bytes = _round_up(B, 8) * 128 * 4
    anchors_bytes = 2 * _round_up(D, 8) * lane_tm * 4
    small_bytes = 3 * 2 * 8 * lane_tm * 4
    temps_bytes = 8 * _round_up(B, 8) * lane_tm * 4
    vmem_limit = (2 * (keys_bytes + key_lbl_bytes) + anchors_bytes + small_bytes
                  + temps_bytes + (4 << 20))
    vmem_limit = int(min(max(vmem_limit, 32 << 20), 128 << 20))
    # TODO(synk): for very large B on v7x (64 MiB/TC), strip-mine the key axis inside the
    # kernel (pass 1: global col-max, pass 2: masked sums) to bound temps to O(TM*TK).

    cost = pl.CostEstimate(
        flops=2 * Bp * B * D + 8 * Bp * B,
        transcendentals=2 * Bp * B,
        bytes_accessed=4 * (Bp * D + B * D + 3 * Bp + 2 * B),
    )

    def build(resident_single_buffered):
        resident_kwargs = (
            {"pipeline_mode": pl.Buffered(1)} if resident_single_buffered else {}
        )
        return pl.pallas_call(
            functools.partial(_supcon_kernel,
                              inv_temperature=float(1.0 / temperature),
                              precision=precision),
            out_shape=jax.ShapeDtypeStruct((1, Bp), jnp.float32),
            grid=grid,
            in_specs=[
                pl.BlockSpec((1, TM), lambda i: (0, i)),                     # anchor labels
                pl.BlockSpec((1, TM), lambda i: (0, i)),                     # cardinality
                pl.BlockSpec((D, TM), lambda i: (0, i)),                     # anchors (pre-T)
                pl.BlockSpec((B, D), lambda i: (0, 0), **resident_kwargs),   # keys (resident)
                pl.BlockSpec((B, 1), lambda i: (0, 0), **resident_kwargs),   # key labels
            ],
            out_specs=pl.BlockSpec((1, TM), lambda i: (0, i)),
            compiler_params=pltpu.CompilerParams(
                dimension_semantics=("parallel",),
                vmem_limit_bytes=vmem_limit,
            ),
            cost_estimate=cost,
        )

    args = (t_anc, card, q_t, projections, t_key)
    try:
        # Constant-index_map resident operands: single-buffer them (halves their VMEM).
        per_anchor = build(True)(*args)
    except Exception:
        # Some jax versions do not honor pipeline_mode on the main pallas_call path.
        per_anchor = build(False)(*args)

    # Mean over the real (unpadded) anchors; padded lanes are finite and discarded.
    return jnp.mean(per_anchor[0, :B])


def _reference(projections, targets, temperature=0.07):
    # Pure-JAX mirror of the PyTorch forward (matmul at HIGHEST precision to match the
    # kernel's default precision choice).
    dot = jnp.dot(projections, projections.T,
                  precision=lax.Precision.HIGHEST) / temperature
    exp_dot = jnp.exp(dot - jnp.max(dot, axis=1, keepdims=True)) + 1e-5
    mask_sim = (targets[:, None] == targets[None, :]).astype(jnp.float32)
    mask_anchor = 1.0 - jnp.eye(projections.shape[0], dtype=jnp.float32)
    mask_comb = mask_sim * mask_anchor
    card = jnp.sum(mask_comb, axis=1)
    log_prob = -jnp.log(exp_dot / jnp.sum(exp_dot * mask_anchor, axis=1, keepdims=True))
    per_sample = jnp.sum(log_prob * mask_comb, axis=1) / card
    return jnp.mean(per_sample)


if __name__ == "__main__":
    key = jax.random.PRNGKey(0)
    B, D = 8, 32
    projections = jax.random.normal(key, (B, D), dtype=jnp.float32)
    # Deterministic labels with every class appearing at least twice (cardinality > 0;
    # a singleton class would yield NaN in both torch and this kernel).
    targets = jnp.array([0, 0, 1, 1, 2, 2, 0, 1], dtype=jnp.int32)

    loss = jax.block_until_ready(
        supervised_contrastive_loss(projections, targets, temperature=0.07))
    ref = jax.block_until_ready(_reference(projections, targets, temperature=0.07))
    assert jnp.allclose(loss, ref, rtol=1e-5, atol=1e-4), (loss, ref)
    print("KERNEL_OK")
</pallas_src>

<mosaic_0001>
module attributes {stable_mosaic.version = 11 : i64} {
  func.func @_supcon_kernel(%arg0: i32, %arg1: memref<1x8xi32, #tpu.memory_space<vmem>>, %arg2: memref<1x8xf32, #tpu.memory_space<vmem>>, %arg3: memref<32x8xf32, #tpu.memory_space<vmem>>, %arg4: memref<8x32xf32, #tpu.memory_space<vmem>>, %arg5: memref<8x1xi32, #tpu.memory_space<vmem>>, %arg6: memref<1x8xf32, #tpu.memory_space<vmem>>) attributes {dimension_semantics = [#tpu.dimension_semantics<parallel>], iteration_bounds = array<i64: 1>, scalar_prefetch = 0 : i64, scratch_operands = 0 : i64, tpu.core_type = #tpu.core_type<tc>, window_params = [{transform_indices = @transform_0, window_bounds = array<i64: 1, 8>}, {transform_indices = @transform_1, window_bounds = array<i64: 1, 8>}, {transform_indices = @transform_2, window_bounds = array<i64: 32, 8>}, {pipeline_mode = #tpu.pipeline_mode<synchronous>, transform_indices = @transform_3, window_bounds = array<i64: 8, 32>}, {pipeline_mode = #tpu.pipeline_mode<synchronous>, transform_indices = @transform_4, window_bounds = array<i64: 8, 1>}, {transform_indices = @transform_5, window_bounds = array<i64: 1, 8>}]} {
    %c0 = arith.constant 0 : index
    %c0_0 = arith.constant 0 : index
    %0 = vector.load %arg3[%c0, %c0_0] : memref<32x8xf32, #tpu.memory_space<vmem>>, vector<32x8xf32>
    %cst = arith.constant 14.2857141 : f32
    %1 = vector.broadcast %cst : f32 to vector<32x8xf32>
    %2 = arith.mulf %0, %1 : vector<32x8xf32>
    %c0_1 = arith.constant 0 : index
    %c0_2 = arith.constant 0 : index
    %3 = vector.load %arg4[%c0_1, %c0_2] : memref<8x32xf32, #tpu.memory_space<vmem>>, vector<8x32xf32>
    %cst_3 = arith.constant dense<0.000000e+00> : vector<8x8xf32>
    %4 = tpu.matmul %3, %2, %cst_3 {dimension_numbers = #tpu.dot_dimension_numbers<[1], [0], [0], [1], [0, 0, 1, 1], [], []>, precision = #tpu.contract_precision<fp32>} : vector<8x32xf32>, vector<32x8xf32>, vector<8x8xf32> -> vector<8x8xf32>
    %cst_4 = arith.constant dense<0xFF800000> : vector<8xf32>
    %5 = vector.multi_reduction <maximumf>, %4, %cst_4 [0] : vector<8x8xf32> to vector<8xf32>
    %6 = vector.shape_cast %5 : vector<8xf32> to vector<1x8xf32>
    %7 = vector.broadcast %6 : vector<1x8xf32> to vector<8x8xf32>
    %8 = arith.subf %4, %7 : vector<8x8xf32>
    %9 = math.exp %8 : vector<8x8xf32>
    %cst_5 = arith.constant 9.99999974E-6 : f32
    %10 = vector.broadcast %cst_5 : f32 to vector<8x8xf32>
    %11 = arith.addf %9, %10 : vector<8x8xf32>
    %12 = math.log %11 : vector<8x8xf32>
    %c8_i32 = arith.constant 8 : i32
    %13 = arith.muli %arg0, %c8_i32 : i32
    %14 = tpu.iota {dimensions = array<i32: 0>} : vector<8x8xi32>
    %15 = tpu.iota {dimensions = array<i32: 1>} : vector<8x8xi32>
    %16 = vector.broadcast %13 : i32 to vector<8x8xi32>
    %17 = arith.addi %15, %16 : vector<8x8xi32>
    %18 = arith.cmpi ne, %14, %17 : vector<8x8xi32>
    %19 = arith.extui %18 : vector<8x8xi1> to vector<8x8xi32>
    %20 = arith.sitofp %19 : vector<8x8xi32> to vector<8x8xf32>
    %c0_6 = arith.constant 0 : index
    %c0_7 = arith.constant 0 : index
    %21 = vector.load %arg5[%c0_6, %c0_7] : memref<8x1xi32, #tpu.memory_space<vmem>>, vector<8x1xi32>
    %c0_8 = arith.constant 0 : index
    %c0_9 = arith.constant 0 : index
    %22 = vector.load %arg1[%c0_8, %c0_9] : memref<1x8xi32, #tpu.memory_space<vmem>>, vector<1x8xi32>
    %23 = vector.broadcast %21 : vector<8x1xi32> to vector<8x8xi32>
    %24 = vector.broadcast %22 : vector<1x8xi32> to vector<8x8xi32>
    %25 = arith.cmpi eq, %23, %24 : vector<8x8xi32>
    %26 = arith.extui %25 : vector<8x8xi1> to vector<8x8xi32>
    %27 = arith.sitofp %26 : vector<8x8xi32> to vector<8x8xf32>
    %28 = arith.mulf %27, %20 : vector<8x8xf32>
    %29 = arith.mulf %11, %20 : vector<8x8xf32>
    %cst_10 = arith.constant dense<0.000000e+00> : vector<8xf32>
    %30 = vector.multi_reduction <add>, %29, %cst_10 [0] : vector<8x8xf32> to vector<8xf32>
    %31 = vector.shape_cast %30 : vector<8xf32> to vector<1x8xf32>
    %32 = arith.mulf %12, %28 : vector<8x8xf32>
    %cst_11 = arith.constant dense<0.000000e+00> : vector<8xf32>
    %33 = vector.multi_reduction <add>, %32, %cst_11 [0] : vector<8x8xf32> to vector<8xf32>
    %34 = vector.shape_cast %33 : vector<8xf32> to vector<1x8xf32>
    %35 = math.log %31 : vector<1x8xf32>
    %c0_12 = arith.constant 0 : index
    %c0_13 = arith.constant 0 : index
    %36 = vector.load %arg2[%c0_12, %c0_13] : memref<1x8xf32, #tpu.memory_space<vmem>>, vector<1x8xf32>
    %37 = arith.divf %34, %36 : vector<1x8xf32>
    %38 = arith.subf %35, %37 : vector<1x8xf32>
    %c0_14 = arith.constant 0 : index
    %c0_15 = arith.constant 0 : index
    %39 = vector.load %arg6[%c0_14, %c0_15] : memref<1x8xf32, #tpu.memory_space<vmem>>, vector<1x8xf32>
    tpu.vector_store %arg6[%c0_14, %c0_15], %38 {strides = array<i32>} : memref<1x8xf32, #tpu.memory_space<vmem>>, vector<1x8xf32>,
    return
  }
  func.func @transform_0(%arg0: i32) -> (i32, i32) {
    %c0_i32 = arith.constant 0 : i32
    %c0_i32_0 = arith.constant 0 : i32
    return %c0_i32, %arg0 : i32, i32
  }
  func.func @transform_1(%arg0: i32) -> (i32, i32) {
    %c0_i32 = arith.constant 0 : i32
    %c0_i32_0 = arith.constant 0 : i32
    return %c0_i32, %arg0 : i32, i32
  }
  func.func @transform_2(%arg0: i32) -> (i32, i32) {
    %c0_i32 = arith.constant 0 : i32
    %c0_i32_0 = arith.constant 0 : i32
    return %c0_i32, %arg0 : i32, i32
  }
  func.func @transform_3(%arg0: i32) -> (i32, i32) {
    %c0_i32 = arith.constant 0 : i32
    %c0_i32_0 = arith.constant 0 : i32
    %c0_i32_1 = arith.constant 0 : i32
    return %c0_i32, %c0_i32_0 : i32, i32
  }
  func.func @transform_4(%arg0: i32) -> (i32, i32) {
    %c0_i32 = arith.constant 0 : i32
    %c0_i32_0 = arith.constant 0 : i32
    %c0_i32_1 = arith.constant 0 : i32
    return %c0_i32, %c0_i32_0 : i32, i32
  }
  func.func @transform_5(%arg0: i32) -> (i32, i32) {
    %c0_i32 = arith.constant 0 : i32
    %c0_i32_0 = arith.constant 0 : i32
    return %c0_i32, %arg0 : i32, i32
  }
}

module attributes {stable_mosaic.version = 11 : i64} {
  func.func @_supcon_kernel(%arg0: i32, %arg1: memref<1x8xi32, #tpu.memory_space<vmem>>, %arg2: memref<1x8xf32, #tpu.memory_space<vmem>>, %arg3: memref<32x8xf32, #tpu.memory_space<vmem>>, %arg4: memref<8x32xf32, #tpu.memory_space<vmem>>, %arg5: memref<8x1xi32, #tpu.memory_space<vmem>>, %arg6: memref<1x8xf32, #tpu.memory_space<vmem>>) attributes {dimension_semantics = [#tpu.dimension_semantics<parallel>], iteration_bounds = array<i64: 1>, scalar_prefetch = 0 : i64, scratch_operands = 0 : i64, tpu.core_type = #tpu.core_type<tc>, window_params = [{transform_indices = @transform_0, window_bounds = array<i64: 1, 8>}, {transform_indices = @transform_1, window_bounds = array<i64: 1, 8>}, {transform_indices = @transform_2, window_bounds = array<i64: 32, 8>}, {pipeline_mode = #tpu.pipeline_mode<synchronous>, transform_indices = @transform_3, window_bounds = array<i64: 8, 32>}, {pipeline_mode = #tpu.pipeline_mode<synchronous>, transform_indices = @transform_4, window_bounds = array<i64: 8, 1>}, {transform_indices = @transform_5, window_bounds = array<i64: 1, 8>}]} {
    %c0 = arith.constant 0 : index
    %c0_0 = arith.constant 0 : index
    %0 = vector.load %arg3[%c0, %c0_0] : memref<32x8xf32, #tpu.memory_space<vmem>>, vector<32x8xf32>
    %cst = arith.constant 14.2857141 : f32
    %1 = vector.broadcast %cst : f32 to vector<32x8xf32>
    %2 = arith.mulf %0, %1 : vector<32x8xf32>
    %c0_1 = arith.constant 0 : index
    %c0_2 = arith.constant 0 : index
    %3 = vector.load %arg4[%c0_1, %c0_2] : memref<8x32xf32, #tpu.memory_space<vmem>>, vector<8x32xf32>
    %cst_3 = arith.constant dense<0.000000e+00> : vector<8x8xf32>
    %4 = tpu.matmul %3, %2, %cst_3 {dimension_numbers = #tpu.dot_dimension_numbers<[1], [0], [0], [1], [0, 0, 1, 1], [], []>, precision = #tpu.contract_precision<fp32>} : vector<8x32xf32>, vector<32x8xf32>, vector<8x8xf32> -> vector<8x8xf32>
    %cst_4 = arith.constant dense<0xFF800000> : vector<8xf32>
    %5 = vector.multi_reduction <maximumf>, %4, %cst_4 [0] : vector<8x8xf32> to vector<8xf32>
    %6 = vector.shape_cast %5 : vector<8xf32> to vector<1x8xf32>
    %7 = vector.broadcast %6 : vector<1x8xf32> to vector<8x8xf32>
    %8 = arith.subf %4, %7 : vector<8x8xf32>
    %9 = math.exp %8 : vector<8x8xf32>
    %cst_5 = arith.constant 9.99999974E-6 : f32
    %10 = vector.broadcast %cst_5 : f32 to vector<8x8xf32>
    %11 = arith.addf %9, %10 : vector<8x8xf32>
    %12 = math.log %11 : vector<8x8xf32>
    %c8_i32 = arith.constant 8 : i32
    %13 = arith.muli %arg0, %c8_i32 : i32
    %14 = tpu.iota {dimensions = array<i32: 0>} : vector<8x8xi32>
    %15 = tpu.iota {dimensions = array<i32: 1>} : vector<8x8xi32>
    %16 = vector.broadcast %13 : i32 to vector<8x8xi32>
    %17 = arith.addi %15, %16 : vector<8x8xi32>
    %18 = arith.cmpi ne, %14, %17 : vector<8x8xi32>
    %19 = arith.extui %18 : vector<8x8xi1> to vector<8x8xi32>
    %20 = arith.sitofp %19 : vector<8x8xi32> to vector<8x8xf32>
    %c0_6 = arith.constant 0 : index
    %c0_7 = arith.constant 0 : index
    %21 = vector.load %arg5[%c0_6, %c0_7] : memref<8x1xi32, #tpu.memory_space<vmem>>, vector<8x1xi32>
    %c0_8 = arith.constant 0 : index
    %c0_9 = arith.constant 0 : index
    %22 = vector.load %arg1[%c0_8, %c0_9] : memref<1x8xi32, #tpu.memory_space<vmem>>, vector<1x8xi32>
    %23 = vector.broadcast %21 : vector<8x1xi32> to vector<8x8xi32>
    %24 = vector.broadcast %22 : vector<1x8xi32> to vector<8x8xi32>
    %25 = arith.cmpi eq, %23, %24 : vector<8x8xi32>
    %26 = arith.extui %25 : vector<8x8xi1> to vector<8x8xi32>
    %27 = arith.sitofp %26 : vector<8x8xi32> to vector<8x8xf32>
    %28 = arith.mulf %27, %20 : vector<8x8xf32>
    %29 = arith.mulf %11, %20 : vector<8x8xf32>
    %cst_10 = arith.constant dense<0.000000e+00> : vector<8xf32>
    %30 = vector.multi_reduction <add>, %29, %cst_10 [0] : vector<8x8xf32> to vector<8xf32>
    %31 = vector.shape_cast %30 : vector<8xf32> to vector<1x8xf32>
    %32 = arith.mulf %12, %28 : vector<8x8xf32>
    %cst_11 = arith.constant dense<0.000000e+00> : vector<8xf32>
    %33 = vector.multi_reduction <add>, %32, %cst_11 [0] : vector<8x8xf32> to vector<8xf32>
    %34 = vector.shape_cast %33 : vector<8xf32> to vector<1x8xf32>
    %35 = math.log %31 : vector<1x8xf32>
    %c0_12 = arith.constant 0 : index
    %c0_13 = arith.constant 0 : index
    %36 = vector.load %arg2[%c0_12, %c0_13] : memref<1x8xf32, #tpu.memory_space<vmem>>, vector<1x8xf32>
    %37 = arith.divf %34, %36 : vector<1x8xf32>
    %38 = arith.subf %35, %37 : vector<1x8xf32>
    %c0_14 = arith.constant 0 : index
    %c0_15 = arith.constant 0 : index
    %39 = vector.load %arg6[%c0_14, %c0_15] : memref<1x8xf32, #tpu.memory_space<vmem>>, vector<1x8xf32>
    tpu.vector_store %arg6[%c0_14, %c0_15], %38 {strides = array<i32>} : memref<1x8xf32, #tpu.memory_space<vmem>>, vector<1x8xf32>,
    return
  }
  func.func @transform_0(%arg0: i32) -> (i32, i32) {
    %c0_i32 = arith.constant 0 : i32
    %c0_i32_0 = arith.constant 0 : i32
    return %c0_i32, %arg0 : i32, i32
  }
  func.func @transform_1(%arg0: i32) -> (i32, i32) {
    %c0_i32 = arith.constant 0 : i32
    %c0_i32_0 = arith.constant 0 : i32
    return %c0_i32, %arg0 : i32, i32
  }
  func.func @transform_2(%arg0: i32) -> (i32, i32) {
    %c0_i32 = arith.constant 0 : i32
    %c0_i32_0 = arith.constant 0 : i32
    return %c0_i32, %arg0 : i32, i32
  }
  func.func @transform_3(%arg0: i32) -> (i32, i32) {
    %c0_i32 = arith.constant 0 : i32
    %c0_i32_0 = arith.constant 0 : i32
    %c0_i32_1 = arith.constant 0 : i32
    return %c0_i32, %c0_i32_0 : i32, i32
  }
  func.func @transform_4(%arg0: i32) -> (i32, i32) {
    %c0_i32 = arith.constant 0 : i32
    %c0_i32_0 = arith.constant 0 : i32
    %c0_i32_1 = arith.constant 0 : i32
    return %c0_i32, %c0_i32_0 : i32, i32
  }
  func.func @transform_5(%arg0: i32) -> (i32, i32) {
    %c0_i32 = arith.constant 0 : i32
    %c0_i32_0 = arith.constant 0 : i32
    return %c0_i32, %arg0 : i32, i32
  }
}

</mosaic_0001>

<llo_original>
// kernel: tpu_custom_call.1
$region0: #{tpu_custom_call.1}
  #allocation0 [shape = 'u32[]', space=smem, size = 0x4, offset = 0x4, fixed_abs, tag = 'smem constant byte address 0x4 - core index']
  #allocation1 [shape = 'u32[72,128]{1,0:T(1,128)}', space=vmem, size = 0x9000, scoped, tag = 'internal scratch']
  %s0 = inlined_call_operand.vmem [shape: s32[1,8], index: 0, kind: input, shape index: {}]
  %s1 = inlined_call_operand.vmem [shape: f32[1,8], index: 1, kind: input, shape index: {}]
  %s2 = inlined_call_operand.vmem [shape: f32[32,8], index: 2, kind: input, shape index: {}]
  %s3 = inlined_call_operand.vmem [shape: f32[8,32], index: 3, kind: input, shape index: {}]
  %s4 = inlined_call_operand.vmem [shape: s32[8,1], index: 4, kind: input, shape index: {}]
  %s5 = inlined_call_operand.hbm [shape: f32[1,8], index: 5, kind: output, shape index: {}]
  %s6 = sld [smem:[#allocation0]]
  $region30: #{tpu_custom_call.1} parent=0
    _
  %s8 = ssub.s32 1, %s6
  %s9 = scalar_select 0, %s8, %s6
  $region1: #{tpu_custom_call.1} parent=0
    #allocation2 [shape = 'u8[512]{0}', space=vmem, size = 0x400, scoped, tag = 'output window, operand 0, single buffered']
    #allocation3 [shape = 's32[1]{0}', space=sflag, size = 0x4, scoped, tag = 'scoped memory for tpu_custom_call.1']
    %10 = vsyncpa [#allocation3], 0
    // Predicated region
    $region2: #{tpu_custom_call.1} parent=1 // pred_check
      _
    $region3: #{tpu_custom_call.1} parent=1 // pred_check_branch
      %12 = sbr.rel (0) target = $region5
    $region4: #{tpu_custom_call.1} parent=1 // pred_region
      _
    $region5: #{tpu_custom_call.1} parent=1 // pred_fallthru
      _
    // Predicated region
    $region6: #{tpu_custom_call.1} parent=1 // pred_check
      _
    $region7: #{tpu_custom_call.1} parent=1 // pred_check_branch
      %14 = sbr.rel (0) target = $region9
    $region8: #{tpu_custom_call.1} parent=1 // pred_region
      _
    $region9: #{tpu_custom_call.1} parent=1 // pred_fallthru
      _
    // Predicated region
    $region10: #{tpu_custom_call.1} parent=1 // pred_check
      _
    $region11: #{tpu_custom_call.1} parent=1 // pred_check_branch
      %16 = sbr.rel (0) target = $region13
    $region12: #{tpu_custom_call.1} parent=1 // pred_region
      _
    $region13: #{tpu_custom_call.1} parent=1 // pred_fallthru
      _
    // Predicated region
    $region14: #{tpu_custom_call.1} parent=1 // pred_check
      _
    $region15: #{tpu_custom_call.1} parent=1 // pred_check_branch
      %18 = sbr.rel (0) target = $region17
    $region16: #{tpu_custom_call.1} parent=1 // pred_region
      _
    $region17: #{tpu_custom_call.1} parent=1 // pred_fallthru
      _
    // Predicated region
    $region18: #{tpu_custom_call.1} parent=1 // pred_check
      _
    $region19: #{tpu_custom_call.1} parent=1 // pred_check_branch
      %20 = sbr.rel (0) target = $region21
    $region20: #{tpu_custom_call.1} parent=1 // pred_region
      _
    $region21: #{tpu_custom_call.1} parent=1 // pred_fallthru
      _
    %v21 = vld [vmem:[%s2] sm:$0xff]
    %v22 = vld [vmem:[%s2 + $0x8] sm:$0xff]
    %v23 = vld [vmem:[%s2 + $0x10] sm:$0xff]
    %v24 = vld [vmem:[%s2 + $0x18] sm:$0xff]
    %v25 = vmul.f32 %v21, 14.285714
    %v26 = vmul.f32 %v22, 14.285714
    %v27 = vmul.f32 %v23, 14.285714
    %v28 = vmul.f32 %v24, 14.285714
    %v29 = vld [vmem:[%s3] sm:$0xff]
    %vm30 = vcmask 261120
    %v32 = vsel %vm30, %v29, 0
    %34 = vmatpush.msra.mxu0 0.0
    %35 = vmatpush.msra.mxu0 0.0
    %36 = vmatpush.msra.mxu0 0.0
    %37 = vmatpush.msra.mxu0 0.0
    %38 = vmatpush.msra.mxu0 0.0
    %39 = vmatpush.msra.mxu0 0.0
    %40 = vmatpush.msra.mxu0 0.0
    %41 = vmatpush.msra.mxu0 0.0
    %42 = vmatpush.msra.mxu0 0.0
    %43 = vmatpush.msra.mxu0 0.0
    %44 = vmatpush.msra.mxu0 0.0
    %45 = vmatpush.msra.mxu0 0.0
    %v46 = vand.u32 %v28, 4294901760
    %47 = vmatpush.msra.mxu0 %v46
    %v48 = vand.u32 %v27, 4294901760
    %49 = vmatpush.msra.mxu0 %v48
    %v50 = vand.u32 %v26, 4294901760
    %51 = vmatpush.msra.mxu0 %v50
    %v52 = vand.u32 %v25, 4294901760
    %53 = vmatpush.msra.mxu0 %v52
    %v54 = vand.u32 %v32, 4294901760
    %v55 = vsub.f32 %v32, %v54
    %v56 = vand.u32 %v55, 4294901760
    %v57 = vsub.f32 %v55, %v56
    %v58 = vand.u32 %v57, 4294901760
    %59 = vmatmul.f32.gmra.mxu0 %v58
    %v60 = vpop.f32.mrf.mxu0
    %v61 = vadd.f32 0.0, %v60
    %62 = vdwg.mxu0
    %63 = vmatpush.msra.mxu0 0.0
    %64 = vmatpush.msra.mxu0 0.0
    %65 = vmatpush.msra.mxu0 0.0
    %66 = vmatpush.msra.mxu0 0.0
    %67 = vmatpush.msra.mxu0 0.0
    %68 = vmatpush.msra.mxu0 0.0
    %69 = vmatpush.msra.mxu0 0.0
    %70 = vmatpush.msra.mxu0 0.0
    %71 = vmatpush.msra.mxu0 0.0
    %72 = vmatpush.msra.mxu0 0.0
    %73 = vmatpush.msra.mxu0 0.0
    %74 = vmatpush.msra.mxu0 0.0
    %v75 = vand.u32 %v28, 4294901760
    %v76 = vsub.f32 %v28, %v75
    %v77 = vand.u32 %v76, 4294901760
    %v78 = vsub.f32 %v76, %v77
    %v79 = vand.u32 %v78, 4294901760
    %80 = vmatpush.msra.mxu0 %v79
    %v81 = vand.u32 %v27, 4294901760
    %v82 = vsub.f32 %v27, %v81
    %v83 = vand.u32 %v82, 4294901760
    %v84 = vsub.f32 %v82, %v83
    %v85 = vand.u32 %v84, 4294901760
    %86 = vmatpush.msra.mxu0 %v85
    %v87 = vand.u32 %v26, 4294901760
    %v88 = vsub.f32 %v26, %v87
    %v89 = vand.u32 %v88, 4294901760
    %v90 = vsub.f32 %v88, %v89
    %v91 = vand.u32 %v90, 4294901760
    %92 = vmatpush.msra.mxu0 %v91
    %v93 = vand.u32 %v25, 4294901760
    %v94 = vsub.f32 %v25, %v93
    %v95 = vand.u32 %v94, 4294901760
    %v96 = vsub.f32 %v94, %v95
    %v97 = vand.u32 %v96, 4294901760
    %98 = vmatpush.msra.mxu0 %v97
    %v99 = vand.u32 %v32, 4294901760
    %100 = vmatmul.f32.gmra.mxu0 %v99
    %v101 = vpop.f32.mrf.mxu0
    %v102 = vadd.f32 %v61, %v101
    %103 = vdwg.mxu0
    %104 = vmatpush.msra.mxu0 0.0
    %105 = vmatpush.msra.mxu0 0.0
    %106 = vmatpush.msra.mxu0 0.0
    %107 = vmatpush.msra.mxu0 0.0
    %108 = vmatpush.msra.mxu0 0.0
    %109 = vmatpush.msra.mxu0 0.0
    %110 = vmatpush.msra.mxu0 0.0
    %111 = vmatpush.msra.mxu0 0.0
    %112 = vmatpush.msra.mxu0 0.0
    %113 = vmatpush.msra.mxu0 0.0
    %114 = vmatpush.msra.mxu0 0.0
    %115 = vmatpush.msra.mxu0 0.0
    %v116 = vand.u32 %v28, 4294901760
    %v117 = vsub.f32 %v28, %v116
    %118 = vmatpush.msra.mxu0 %v117
    %v119 = vand.u32 %v27, 4294901760
    %v120 = vsub.f32 %v27, %v119
    %121 = vmatpush.msra.mxu0 %v120
    %v122 = vand.u32 %v26, 4294901760
    %v123 = vsub.f32 %v26, %v122
    %124 = vmatpush.msra.mxu0 %v123
    %v125 = vand.u32 %v25, 4294901760
    %v126 = vsub.f32 %v25, %v125
    %127 = vmatpush.msra.mxu0 %v126
    %v128 = vand.u32 %v32, 4294901760
    %v129 = vsub.f32 %v32, %v128
    %130 = vmatmul.f32.gmra.mxu0 %v129
    %v131 = vpop.f32.mrf.mxu0
    %v132 = vadd.f32 %v102, %v131
    %133 = vdwg.mxu0
    %134 = vmatpush.msra.mxu0 0.0
    %135 = vmatpush.msra.mxu0 0.0
    %136 = vmatpush.msra.mxu0 0.0
    %137 = vmatpush.msra.mxu0 0.0
    %138 = vmatpush.msra.mxu0 0.0
    %139 = vmatpush.msra.mxu0 0.0
    %140 = vmatpush.msra.mxu0 0.0
    %141 = vmatpush.msra.mxu0 0.0
    %142 = vmatpush.msra.mxu0 0.0
    %143 = vmatpush.msra.mxu0 0.0
    %144 = vmatpush.msra.mxu0 0.0
    %145 = vmatpush.msra.mxu0 0.0
    %v146 = vand.u32 %v28, 4294901760
    %147 = vmatpush.msra.mxu0 %v146
    %v148 = vand.u32 %v27, 4294901760
    %149 = vmatpush.msra.mxu0 %v148
    %v150 = vand.u32 %v26, 4294901760
    %151 = vmatpush.msra.mxu0 %v150
    %v152 = vand.u32 %v25, 4294901760
    %153 = vmatpush.msra.mxu0 %v152
    %v154 = vand.u32 %v32, 4294901760
    %v155 = vsub.f32 %v32, %v154
    %v156 = vand.u32 %v155, 4294901760
    %157 = vmatmul.f32.gmra.mxu0 %v156
    %v158 = vpop.f32.mrf.mxu0
    %v159 = vadd.f32 %v132, %v158
    %160 = vdwg.mxu0
    %161 = vmatpush.msra.mxu0 0.0
    %162 = vmatpush.msra.mxu0 0.0
    %163 = vmatpush.msra.mxu0 0.0
    %164 = vmatpush.msra.mxu0 0.0
    %165 = vmatpush.msra.mxu0 0.0
    %166 = vmatpush.msra.mxu0 0.0
    %167 = vmatpush.msra.mxu0 0.0
    %168 = vmatpush.msra.mxu0 0.0
    %169 = vmatpush.msra.mxu0 0.0
    %170 = vmatpush.msra.mxu0 0.0
    %171 = vmatpush.msra.mxu0 0.0
    %172 = vmatpush.msra.mxu0 0.0
    %v173 = vand.u32 %v28, 4294901760
    %v174 = vsub.f32 %v28, %v173
    %v175 = vand.u32 %v174, 4294901760
    %176 = vmatpush.msra.mxu0 %v175
    %v177 = vand.u32 %v27, 4294901760
    %v178 = vsub.f32 %v27, %v177
    %v179 = vand.u32 %v178, 4294901760
    %180 = vmatpush.msra.mxu0 %v179
    %v181 = vand.u32 %v26, 4294901760
    %v182 = vsub.f32 %v26, %v181
    %v183 = vand.u32 %v182, 4294901760
    %184 = vmatpush.msra.mxu0 %v183
    %v185 = vand.u32 %v25, 4294901760
    %v186 = vsub.f32 %v25, %v185
    %v187 = vand.u32 %v186, 4294901760
    %188 = vmatpush.msra.mxu0 %v187
    %v189 = vand.u32 %v32, 4294901760
    %190 = vmatmul.f32.gmra.mxu0 %v189
    %v191 = vpop.f32.mrf.mxu0
    %v192 = vadd.f32 %v159, %v191
    %193 = vdwg.mxu0
    %194 = vmatpush.msra.mxu0 0.0
    %195 = vmatpush.msra.mxu0 0.0
    %196 = vmatpush.msra.mxu0 0.0
    %197 = vmatpush.msra.mxu0 0.0
    %198 = vmatpush.msra.mxu0 0.0
    %199 = vmatpush.msra.mxu0 0.0
    %200 = vmatpush.msra.mxu0 0.0
    %201 = vmatpush.msra.mxu0 0.0
    %202 = vmatpush.msra.mxu0 0.0
    %203 = vmatpush.msra.mxu0 0.0
    %204 = vmatpush.msra.mxu0 0.0
    %205 = vmatpush.msra.mxu0 0.0
    %v206 = vand.u32 %v28, 4294901760
    %207 = vmatpush.msra.mxu0 %v206
    %v208 = vand.u32 %v27, 4294901760
    %209 = vmatpush.msra.mxu0 %v208
    %v210 = vand.u32 %v26, 4294901760
    %211 = vmatpush.msra.mxu0 %v210
    %v212 = vand.u32 %v25, 4294901760
    %213 = vmatpush.msra.mxu0 %v212
    %v214 = vand.u32 %v32, 4294901760
    %215 = vmatmul.f32.gmra.mxu0 %v214
    %v216 = vpop.f32.mrf.mxu0
    %v217 = vadd.f32 %v192, %v216
    %218 = vdwg.mxu0
    %vm219 = vcmask 64512
    %v220 = vsel %vm219, %v217, -inf
    %v221 = vrot.slane %v220, 4
    %v222 = vmax.f32 %v220, %v221
    %v223 = vrot.slane %v222, 2
    %v224 = vmax.f32 %v222, %v223
    %v225 = vrot.slane %v224, 1
    %v226 = vmax.f32 %v224, %v225
    %v227 = vsub.f32 %v217, %v226
    %v228 = vmul.f32 %v227, 1.442695
    %v229 = vpow.pop %v228
    %v230 = vadd.f32 %v229, 1e-05
    %v231 = vlog2.pop %v230
    %v232 = vmul.f32 %v231, 0.6931472
    %s233 = smul.u32 0, 8
    %v234 = vlaneseq
    %v235 = vshrl.u32 %v234, 7
    %v236 = vlaneseq
    %v237 = vand.u32 %v236, 127
    %v238 = vstv %s233
    %v239 = vadd.s32 %v237, %v238
    %vm240 = vcmp.ne.s32.totalorder %v235, %v239
    %v241 = vsel %vm240, 1, 0
    %v242 = vcvt.s32.f32 %v241
    %v243 = vld [vmem:[%s4] sm:$0xff]
    %v244 = vld [vmem:[%s0] sm:$0x1]
    %245 = vset.pattern.permute.xlu0 0
    %246 = vperm.xlu0 %245, %v243
    %v247 = vpop.permute.xlu0 %246
    %v248 = vperm.slane %v244, 0
    %vm249 = vcmp.eq.s32.totalorder %v247, %v248
    %v250 = vsel %vm249, 1, 0
    %v251 = vcvt.s32.f32 %v250
    %v252 = vmul.f32 %v251, %v242
    %v253 = vmul.f32 %v230, %v242
    %v254 = vsel %vm219, %v253, 0.0
    %v255 = vrot.slane %v254, 4
    %v256 = vadd.f32 %v254, %v255
    %v257 = vrot.slane %v256, 2
    %v258 = vadd.f32 %v256, %v257
    %v259 = vrot.slane %v258, 1
    %v260 = vadd.f32 %v258, %v259
    %v261 = vmul.f32 %v232, %v252
    %v262 = vsel %vm219, %v261, 0.0
    %v263 = vrot.slane %v262, 4
    %v264 = vadd.f32 %v262, %v263
    %v265 = vrot.slane %v264, 2
    %v266 = vadd.f32 %v264, %v265
    %v267 = vrot.slane %v266, 1
    %v268 = vadd.f32 %v266, %v267
    %v269 = vlog2.pop %v260
    %v270 = vmul.f32 %v269, 0.6931472
    %v271 = vld [vmem:[%s1] sm:$0x1]
    %v272 = vrcp.pop %v271
    %v273 = vmul.f32 %v271, %v272
    %v274 = vsub.f32 1.0, %v273
    %v275 = vmul.f32 %v272, %v274
    %v276 = vadd.f32 %v272, %v275
    %vm277 = vweird.f32 %v271
    %vm278 = vweird.f32 %v272
    %vm279 = vmor %vm277, %vm278
    %v280 = vsel %vm279, %v272, %v276
    %v281 = vand.u32 2147483647, %v271
    %vm282 = vcmp.eq.f32.partialorder %v281, 8.507059e+37
    %v283 = vand.u32 %v271, 2147483648
    %v284 = vor.u32 1.1754944e-38, %v283
    %v285 = vsel %vm282, %v284, %v280
    %v286 = vmul.f32 %v268, %v285
    %v287 = vsub.f32 %v270, %v286
    %vm288 = vcmask 57344
    %289 = vst.msk [vmem:[#allocation2] sm:$0x1] %vm288, %v287
    // Predicated region
    $region22: #{tpu_custom_call.1} parent=1 // pred_check
      _
    $region23: #{tpu_custom_call.1} parent=1 // pred_check_branch
      %291 = sbr.rel (0) target = $region25
    $region24: #{tpu_custom_call.1} parent=1 // pred_region
      %293 = vsyncadd [#allocation3], 0
      %s295 = sshll.u32 [#allocation2], 4
      %s296 = int_to_ptr.vmem [resolvable:$true] %s295
      %s297 = sshll.u32 %s5, 4
      %s298 = int_to_ptr.hbm [resolvable:$true] %s297
      %300 = dma.vmem_to_hbm [thread:$0]  %s296, 16, %s298, [#allocation3]
    $region25: #{tpu_custom_call.1} parent=1 // pred_fallthru
      _
    // Predicated region
    $region26: #{tpu_custom_call.1} parent=1 // pred_check
      _
    $region27: #{tpu_custom_call.1} parent=1 // pred_check_branch
      %302 = sbr.rel (0) target = $region29
    $region28: #{tpu_custom_call.1} parent=1 // pred_region
      %304 = dma.done [#allocation3], 16
    $region29: #{tpu_custom_call.1} parent=1 // pred_fallthru
      _
    %305 = vsyncpa [#allocation3], 1

// kernel: tpu_custom_call.1
$region0: #{tpu_custom_call.1}
  #allocation0 [shape = 'u32[]', space=smem, size = 0x4, offset = 0x4, fixed_abs, tag = 'smem constant byte address 0x4 - core index']
  #allocation1 [shape = 'u32[72,128]{1,0:T(1,128)}', space=vmem, size = 0x9000, scoped, tag = 'internal scratch']
  %s0 = inlined_call_operand.vmem [shape: s32[1,8], index: 0, kind: input, shape index: {}]
  %s1 = inlined_call_operand.vmem [shape: f32[1,8], index: 1, kind: input, shape index: {}]
  %s2 = inlined_call_operand.vmem [shape: f32[32,8], index: 2, kind: input, shape index: {}]
  %s3 = inlined_call_operand.vmem [shape: f32[8,32], index: 3, kind: input, shape index: {}]
  %s4 = inlined_call_operand.vmem [shape: s32[8,1], index: 4, kind: input, shape index: {}]
  %s5 = inlined_call_operand.hbm [shape: f32[1,8], index: 5, kind: output, shape index: {}]
  %s6 = sld [smem:[#allocation0]]
  $region30: #{tpu_custom_call.1} parent=0
    _
  %s8 = ssub.s32 1, %s6
  %s9 = scalar_select 0, %s8, %s6
  $region1: #{tpu_custom_call.1} parent=0
    #allocation2 [shape = 'u8[512]{0}', space=vmem, size = 0x400, scoped, tag = 'output window, operand 0, single buffered']
    #allocation3 [shape = 's32[1]{0}', space=sflag, size = 0x4, scoped, tag = 'scoped memory for tpu_custom_call.1']
    %10 = vsyncpa [#allocation3], 0
    // Predicated region
    $region2: #{tpu_custom_call.1} parent=1 // pred_check
      _
    $region3: #{tpu_custom_call.1} parent=1 // pred_check_branch
      %12 = sbr.rel (0) target = $region5
    $region4: #{tpu_custom_call.1} parent=1 // pred_region
      _
    $region5: #{tpu_custom_call.1} parent=1 // pred_fallthru
      _
    // Predicated region
    $region6: #{tpu_custom_call.1} parent=1 // pred_check
      _
    $region7: #{tpu_custom_call.1} parent=1 // pred_check_branch
      %14 = sbr.rel (0) target = $region9
    $region8: #{tpu_custom_call.1} parent=1 // pred_region
      _
    $region9: #{tpu_custom_call.1} parent=1 // pred_fallthru
      _
    // Predicated region
    $region10: #{tpu_custom_call.1} parent=1 // pred_check
      _
    $region11: #{tpu_custom_call.1} parent=1 // pred_check_branch
      %16 = sbr.rel (0) target = $region13
    $region12: #{tpu_custom_call.1} parent=1 // pred_region
      _
    $region13: #{tpu_custom_call.1} parent=1 // pred_fallthru
      _
    // Predicated region
    $region14: #{tpu_custom_call.1} parent=1 // pred_check
      _
    $region15: #{tpu_custom_call.1} parent=1 // pred_check_branch
      %18 = sbr.rel (0) target = $region17
    $region16: #{tpu_custom_call.1} parent=1 // pred_region
      _
    $region17: #{tpu_custom_call.1} parent=1 // pred_fallthru
      _
    // Predicated region
    $region18: #{tpu_custom_call.1} parent=1 // pred_check
      _
    $region19: #{tpu_custom_call.1} parent=1 // pred_check_branch
      %20 = sbr.rel (0) target = $region21
    $region20: #{tpu_custom_call.1} parent=1 // pred_region
      _
    $region21: #{tpu_custom_call.1} parent=1 // pred_fallthru
      _
    %v21 = vld [vmem:[%s2] sm:$0xff]
    %v22 = vld [vmem:[%s2 + $0x8] sm:$0xff]
    %v23 = vld [vmem:[%s2 + $0x10] sm:$0xff]
    %v24 = vld [vmem:[%s2 + $0x18] sm:$0xff]
    %v25 = vmul.f32 %v21, 14.285714
    %v26 = vmul.f32 %v22, 14.285714
    %v27 = vmul.f32 %v23, 14.285714
    %v28 = vmul.f32 %v24, 14.285714
    %v29 = vld [vmem:[%s3] sm:$0xff]
    %vm30 = vcmask 261120
    %v32 = vsel %vm30, %v29, 0
    %34 = vmatpush.msra.mxu0 0.0
    %35 = vmatpush.msra.mxu0 0.0
    %36 = vmatpush.msra.mxu0 0.0
    %37 = vmatpush.msra.mxu0 0.0
    %38 = vmatpush.msra.mxu0 0.0
    %39 = vmatpush.msra.mxu0 0.0
    %40 = vmatpush.msra.mxu0 0.0
    %41 = vmatpush.msra.mxu0 0.0
    %42 = vmatpush.msra.mxu0 0.0
    %43 = vmatpush.msra.mxu0 0.0
    %44 = vmatpush.msra.mxu0 0.0
    %45 = vmatpush.msra.mxu0 0.0
    %v46 = vand.u32 %v28, 4294901760
    %47 = vmatpush.msra.mxu0 %v46
    %v48 = vand.u32 %v27, 4294901760
    %49 = vmatpush.msra.mxu0 %v48
    %v50 = vand.u32 %v26, 4294901760
    %51 = vmatpush.msra.mxu0 %v50
    %v52 = vand.u32 %v25, 4294901760
    %53 = vmatpush.msra.mxu0 %v52
    %v54 = vand.u32 %v32, 4294901760
    %v55 = vsub.f32 %v32, %v54
    %v56 = vand.u32 %v55, 4294901760
    %v57 = vsub.f32 %v55, %v56
    %v58 = vand.u32 %v57, 4294901760
    %59 = vmatmul.f32.gmra.mxu0 %v58
    %v60 = vpop.f32.mrf.mxu0
    %v61 = vadd.f32 0.0, %v60
    %62 = vdwg.mxu0
    %63 = vmatpush.msra.mxu0 0.0
    %64 = vmatpush.msra.mxu0 0.0
    %65 = vmatpush.msra.mxu0 0.0
    %66 = vmatpush.msra.mxu0 0.0
    %67 = vmatpush.msra.mxu0 0.0
    %68 = vmatpush.msra.mxu0 0.0
    %69 = vmatpush.msra.mxu0 0.0
    %70 = vmatpush.msra.mxu0 0.0
    %71 = vmatpush.msra.mxu0 0.0
    %72 = vmatpush.msra.mxu0 0.0
    %73 = vmatpush.msra.mxu0 0.0
    %74 = vmatpush.msra.mxu0 0.0
    %v75 = vand.u32 %v28, 4294901760
    %v76 = vsub.f32 %v28, %v75
    %v77 = vand.u32 %v76, 4294901760
    %v78 = vsub.f32 %v76, %v77
    %v79 = vand.u32 %v78, 4294901760
    %80 = vmatpush.msra.mxu0 %v79
    %v81 = vand.u32 %v27, 4294901760
    %v82 = vsub.f32 %v27, %v81
    %v83 = vand.u32 %v82, 4294901760
    %v84 = vsub.f32 %v82, %v83
    %v85 = vand.u32 %v84, 4294901760
    %86 = vmatpush.msra.mxu0 %v85
    %v87 = vand.u32 %v26, 4294901760
    %v88 = vsub.f32 %v26, %v87
    %v89 = vand.u32 %v88, 4294901760
    %v90 = vsub.f32 %v88, %v89
    %v91 = vand.u32 %v90, 4294901760
    %92 = vmatpush.msra.mxu0 %v91
    %v93 = vand.u32 %v25, 4294901760
    %v94 = vsub.f32 %v25, %v93
    %v95 = vand.u32 %v94, 4294901760
    %v96 = vsub.f32 %v94, %v95
    %v97 = vand.u32 %v96, 4294901760
    %98 = vmatpush.msra.mxu0 %v97
    %v99 = vand.u32 %v32, 4294901760
    %100 = vmatmul.f32.gmra.mxu0 %v99
    %v101 = vpop.f32.mrf.mxu0
    %v102 = vadd.f32 %v61, %v101
    %103 = vdwg.mxu0
    %104 = vmatpush.msra.mxu0 0.0
    %105 = vmatpush.msra.mxu0 0.0
    %106 = vmatpush.msra.mxu0 0.0
    %107 = vmatpush.msra.mxu0 0.0
    %108 = vmatpush.msra.mxu0 0.0
    %109 = vmatpush.msra.mxu0 0.0
    %110 = vmatpush.msra.mxu0 0.0
    %111 = vmatpush.msra.mxu0 0.0
    %112 = vmatpush.msra.mxu0 0.0
    %113 = vmatpush.msra.mxu0 0.0
    %114 = vmatpush.msra.mxu0 0.0
    %115 = vmatpush.msra.mxu0 0.0
    %v116 = vand.u32 %v28, 4294901760
    %v117 = vsub.f32 %v28, %v116
    %118 = vmatpush.msra.mxu0 %v117
    %v119 = vand.u32 %v27, 4294901760
    %v120 = vsub.f32 %v27, %v119
    %121 = vmatpush.msra.mxu0 %v120
    %v122 = vand.u32 %v26, 4294901760
    %v123 = vsub.f32 %v26, %v122
    %124 = vmatpush.msra.mxu0 %v123
    %v125 = vand.u32 %v25, 4294901760
    %v126 = vsub.f32 %v25, %v125
    %127 = vmatpush.msra.mxu0 %v126
    %v128 = vand.u32 %v32, 4294901760
    %v129 = vsub.f32 %v32, %v128
    %130 = vmatmul.f32.gmra.mxu0 %v129
    %v131 = vpop.f32.mrf.mxu0
    %v132 = vadd.f32 %v102, %v131
    %133 = vdwg.mxu0
    %134 = vmatpush.msra.mxu0 0.0
    %135 = vmatpush.msra.mxu0 0.0
    %136 = vmatpush.msra.mxu0 0.0
    %137 = vmatpush.msra.mxu0 0.0
    %138 = vmatpush.msra.mxu0 0.0
    %139 = vmatpush.msra.mxu0 0.0
    %140 = vmatpush.msra.mxu0 0.0
    %141 = vmatpush.msra.mxu0 0.0
    %142 = vmatpush.msra.mxu0 0.0
    %143 = vmatpush.msra.mxu0 0.0
    %144 = vmatpush.msra.mxu0 0.0
    %145 = vmatpush.msra.mxu0 0.0
    %v146 = vand.u32 %v28, 4294901760
    %147 = vmatpush.msra.mxu0 %v146
    %v148 = vand.u32 %v27, 4294901760
    %149 = vmatpush.msra.mxu0 %v148
    %v150 = vand.u32 %v26, 4294901760
    %151 = vmatpush.msra.mxu0 %v150
    %v152 = vand.u32 %v25, 4294901760
    %153 = vmatpush.msra.mxu0 %v152
    %v154 = vand.u32 %v32, 4294901760
    %v155 = vsub.f32 %v32, %v154
    %v156 = vand.u32 %v155, 4294901760
    %157 = vmatmul.f32.gmra.mxu0 %v156
    %v158 = vpop.f32.mrf.mxu0
    %v159 = vadd.f32 %v132, %v158
    %160 = vdwg.mxu0
    %161 = vmatpush.msra.mxu0 0.0
    %162 = vmatpush.msra.mxu0 0.0
    %163 = vmatpush.msra.mxu0 0.0
    %164 = vmatpush.msra.mxu0 0.0
    %165 = vmatpush.msra.mxu0 0.0
    %166 = vmatpush.msra.mxu0 0.0
    %167 = vmatpush.msra.mxu0 0.0
    %168 = vmatpush.msra.mxu0 0.0
    %169 = vmatpush.msra.mxu0 0.0
    %170 = vmatpush.msra.mxu0 0.0
    %171 = vmatpush.msra.mxu0 0.0
    %172 = vmatpush.msra.mxu0 0.0
    %v173 = vand.u32 %v28, 4294901760
    %v174 = vsub.f32 %v28, %v173
    %v175 = vand.u32 %v174, 4294901760
    %176 = vmatpush.msra.mxu0 %v175
    %v177 = vand.u32 %v27, 4294901760
    %v178 = vsub.f32 %v27, %v177
    %v179 = vand.u32 %v178, 4294901760
    %180 = vmatpush.msra.mxu0 %v179
    %v181 = vand.u32 %v26, 4294901760
    %v182 = vsub.f32 %v26, %v181
    %v183 = vand.u32 %v182, 4294901760
    %184 = vmatpush.msra.mxu0 %v183
    %v185 = vand.u32 %v25, 4294901760
    %v186 = vsub.f32 %v25, %v185
    %v187 = vand.u32 %v186, 4294901760
    %188 = vmatpush.msra.mxu0 %v187
    %v189 = vand.u32 %v32, 4294901760
    %190 = vmatmul.f32.gmra.mxu0 %v189
    %v191 = vpop.f32.mrf.mxu0
    %v192 = vadd.f32 %v159, %v191
    %193 = vdwg.mxu0
    %194 = vmatpush.msra.mxu0 0.0
    %195 = vmatpush.msra.mxu0 0.0
    %196 = vmatpush.msra.mxu0 0.0
    %197 = vmatpush.msra.mxu0 0.0
    %198 = vmatpush.msra.mxu0 0.0
    %199 = vmatpush.msra.mxu0 0.0
    %200 = vmatpush.msra.mxu0 0.0
    %201 = vmatpush.msra.mxu0 0.0
    %202 = vmatpush.msra.mxu0 0.0
    %203 = vmatpush.msra.mxu0 0.0
    %204 = vmatpush.msra.mxu0 0.0
    %205 = vmatpush.msra.mxu0 0.0
    %v206 = vand.u32 %v28, 4294901760
    %207 = vmatpush.msra.mxu0 %v206
    %v208 = vand.u32 %v27, 4294901760
    %209 = vmatpush.msra.mxu0 %v208
    %v210 = vand.u32 %v26, 4294901760
    %211 = vmatpush.msra.mxu0 %v210
    %v212 = vand.u32 %v25, 4294901760
    %213 = vmatpush.msra.mxu0 %v212
    %v214 = vand.u32 %v32, 4294901760
    %215 = vmatmul.f32.gmra.mxu0 %v214
    %v216 = vpop.f32.mrf.mxu0
    %v217 = vadd.f32 %v192, %v216
    %218 = vdwg.mxu0
    %vm219 = vcmask 64512
    %v220 = vsel %vm219, %v217, -inf
    %v221 = vrot.slane %v220, 4
    %v222 = vmax.f32 %v220, %v221
    %v223 = vrot.slane %v222, 2
    %v224 = vmax.f32 %v222, %v223
    %v225 = vrot.slane %v224, 1
    %v226 = vmax.f32 %v224, %v225
    %v227 = vsub.f32 %v217, %v226
    %v228 = vmul.f32 %v227, 1.442695
    %v229 = vpow.pop %v228
    %v230 = vadd.f32 %v229, 1e-05
    %v231 = vlog2.pop %v230
    %v232 = vmul.f32 %v231, 0.6931472
    %s233 = smul.u32 0, 8
    %v234 = vlaneseq
    %v235 = vshrl.u32 %v234, 7
    %v236 = vlaneseq
    %v237 = vand.u32 %v236, 127
    %v238 = vstv %s233
    %v239 = vadd.s32 %v237, %v238
    %vm240 = vcmp.ne.s32.totalorder %v235, %v239
    %v241 = vsel %vm240, 1, 0
    %v242 = vcvt.s32.f32 %v241
    %v243 = vld [vmem:[%s4] sm:$0xff]
    %v244 = vld [vmem:[%s0] sm:$0x1]
    %245 = vset.pattern.permute.xlu0 0
    %246 = vperm.xlu0 %245, %v243
    %v247 = vpop.permute.xlu0 %246
    %v248 = vperm.slane %v244, 0
    %vm249 = vcmp.eq.s32.totalorder %v247, %v248
    %v250 = vsel %vm249, 1, 0
    %v251 = vcvt.s32.f32 %v250
    %v252 = vmul.f32 %v251, %v242
    %v253 = vmul.f32 %v230, %v242
    %v254 = vsel %vm219, %v253, 0.0
    %v255 = vrot.slane %v254, 4
    %v256 = vadd.f32 %v254, %v255
    %v257 = vrot.slane %v256, 2
    %v258 = vadd.f32 %v256, %v257
    %v259 = vrot.slane %v258, 1
    %v260 = vadd.f32 %v258, %v259
    %v261 = vmul.f32 %v232, %v252
    %v262 = vsel %vm219, %v261, 0.0
    %v263 = vrot.slane %v262, 4
    %v264 = vadd.f32 %v262, %v263
    %v265 = vrot.slane %v264, 2
    %v266 = vadd.f32 %v264, %v265
    %v267 = vrot.slane %v266, 1
    %v268 = vadd.f32 %v266, %v267
    %v269 = vlog2.pop %v260
    %v270 = vmul.f32 %v269, 0.6931472
    %v271 = vld [vmem:[%s1] sm:$0x1]
    %v272 = vrcp.pop %v271
    %v273 = vmul.f32 %v271, %v272
    %v274 = vsub.f32 1.0, %v273
    %v275 = vmul.f32 %v272, %v274
    %v276 = vadd.f32 %v272, %v275
    %vm277 = vweird.f32 %v271
    %vm278 = vweird.f32 %v272
    %vm279 = vmor %vm277, %vm278
    %v280 = vsel %vm279, %v272, %v276
    %v281 = vand.u32 2147483647, %v271
    %vm282 = vcmp.eq.f32.partialorder %v281, 8.507059e+37
    %v283 = vand.u32 %v271, 2147483648
    %v284 = vor.u32 1.1754944e-38, %v283
    %v285 = vsel %vm282, %v284, %v280
    %v286 = vmul.f32 %v268, %v285
    %v287 = vsub.f32 %v270, %v286
    %vm288 = vcmask 57344
    %289 = vst.msk [vmem:[#allocation2] sm:$0x1] %vm288, %v287
    // Predicated region
    $region22: #{tpu_custom_call.1} parent=1 // pred_check
      _
    $region23: #{tpu_custom_call.1} parent=1 // pred_check_branch
      %291 = sbr.rel (0) target = $region25
    $region24: #{tpu_custom_call.1} parent=1 // pred_region
      %293 = vsyncadd [#allocation3], 0
      %s295 = sshll.u32 [#allocation2], 4
      %s296 = int_to_ptr.vmem [resolvable:$true] %s295
      %s297 = sshll.u32 %s5, 4
      %s298 = int_to_ptr.hbm [resolvable:$true] %s297
      %300 = dma.vmem_to_hbm [thread:$0]  %s296, 16, %s298, [#allocation3]
    $region25: #{tpu_custom_call.1} parent=1 // pred_fallthru
      _
    // Predicated region
    $region26: #{tpu_custom_call.1} parent=1 // pred_check
      _
    $region27: #{tpu_custom_call.1} parent=1 // pred_check_branch
      %302 = sbr.rel (0) target = $region29
    $region28: #{tpu_custom_call.1} parent=1 // pred_region
      %304 = dma.done [#allocation3], 16
    $region29: #{tpu_custom_call.1} parent=1 // pred_fallthru
      _
    %305 = vsyncpa [#allocation3], 1

</llo_original>
